<compile_context>
chip_gen: v6e
topology: v6e:2x2x1
jax: 0.10.0
libtpu: 0.0.40
codegen_flags: <defaults>
</compile_context>

<pallas_src>
import functools

import jax
import jax.numpy as jnp
from jax import lax
from jax.experimental import pallas as pl
from jax.experimental.pallas import tpu as pltpu

_LANE = 128
_SUBLANE = 8


def _round_up(n, m):
    return ((n + m - 1) // m) * m


def _image_embedding_kernel(x_ref, w_emb_ref, b_emb_ref, w_att_ref,
                            emb_out_ref, vmean_out_ref, *, num_regions):
    bt, rp, fp = x_ref.shape
    ep = w_emb_ref.shape[1]

    # Flatten (bt, rp) -> rows so the MXU sees one big (bt*rp, fp) @ (fp, ep)
    # matmul. rp is a multiple of 8, so this reshape is layout-free.
    x = x_ref[...].reshape(bt * rp, fp)                         # native dtype
    emb2d = jnp.dot(x, w_emb_ref[...],
                    preferred_element_type=jnp.float32)          # (bt*rp, ep) f32
    emb2d = emb2d + b_emb_ref[...]                               # (1, ep) f32 bias
    emb = emb2d.reshape(bt, rp, ep)                              # (bt, rp, ep) f32

    # Attention logits: Linear(E -> 1) as a VPU multiply + lane reduce
    # (avoids a lane-sparse N=1 MXU matmul). The +b_att bias is dropped:
    # softmax is shift-invariant and the raw logits are never returned.
    w_att = w_att_ref[...].reshape(1, 1, ep)                     # f32
    logits = jnp.sum(emb * w_att, axis=-1, keepdims=True)        # (bt, rp, 1)

    # Mask host-side zero-padded regions out of the softmax.
    if num_regions < rp:
        rid = lax.broadcasted_iota(jnp.int32, (bt, rp, 1), 1)
        logits = jnp.where(rid < num_regions, logits, jnp.float32(-1e30))

    # softmax over the region axis (dim=1 of the original (B, R, 1) tensor).
    logits = logits - jnp.max(logits, axis=1, keepdims=True)
    e = jnp.exp(logits)
    denom = jnp.sum(e, axis=1, keepdims=True)                    # (bt, 1, 1)
    p = e * pl.reciprocal(denom, approx=False)                   # EUP, not VPU divide

    # Weighted sum over regions (VPU multiply + sublane reduce; the main
    # matmul already owns the MXU slot).
    pooled = jnp.sum(p * emb, axis=1, keepdims=True)             # (bt, 1, ep)

    # l2_norm along the embedding dim: x / sqrt(sum(x^2)) == x * rsqrt(...).
    sq = jnp.sum(pooled * pooled, axis=-1, keepdims=True)        # (bt, 1, 1)
    v_mean = pooled * lax.rsqrt(sq)

    emb_out_ref[...] = emb.astype(emb_out_ref.dtype)
    vmean_out_ref[...] = v_mean.astype(vmean_out_ref.dtype)


def image_embedding_forward(encoder_output, w_emb, b_emb, w_att, b_att=None,
                            *, weights_dtype=None, target_mxu_rows=256):
    """Pallas TPU forward of ImageEmbedding.

    encoder_output: (B, R, F)   image-region features
    w_emb: (E, F)  nn.Linear(image_features_size, joint_embeddings_size).weight
    b_emb: (E,)    its bias
    w_att: (1, E)  nn.Linear(joint_embeddings_size, 1).weight
    b_att: (1,)    its bias. Accepted for interface parity only: softmax is
                   shift-invariant and the raw logits are never returned, so the
                   bias is a mathematical no-op in this forward pass.
    weights_dtype: optional compute dtype for x / w_emb (e.g. jnp.bfloat16 on
                   v6e/v7x). Accumulation and the epilogue stay f32.
    Returns (images_embedded (B, R, E), v_mean_embedded (B, E)).
    """
    del b_att  # shift-invariant under softmax; see docstring.

    B, R, F = encoder_output.shape
    E = w_emb.shape[0]
    out_dtype = encoder_output.dtype

    # Hardware-friendly padded dims (lane = 128, sublane = 8).
    Rp = _round_up(R, _SUBLANE)
    Fp = _round_up(F, _LANE)
    Ep = _round_up(E, _LANE)

    # Batch items per grid step: target >= `target_mxu_rows` MXU rows per step;
    # prefer >= 2 grid steps (megacore split on v7x) as long as each step keeps
    # at least 128 rows.
    bt = min(max(1, -(-target_mxu_rows // Rp)), B)
    if bt == B and B > 1:
        half = -(-B // 2)
        if half * Rp >= 128:
            bt = half
    B_pad = _round_up(B, bt)
    num_blocks = B_pad // bt

    # Host-side operand prep: transpose / cast / zero-pad ONCE.
    in_dtype = weights_dtype if weights_dtype is not None else encoder_output.dtype
    x = encoder_output.astype(in_dtype)
    x = jnp.pad(x, ((0, B_pad - B), (0, Rp - R), (0, Fp - F)))

    w_emb_t = jnp.pad(jnp.transpose(w_emb), ((0, Fp - F), (0, Ep - E)))
    w_emb_t = w_emb_t.astype(in_dtype)                                   # (Fp, Ep)
    b_emb_row = jnp.pad(b_emb.reshape(1, E).astype(jnp.float32),
                        ((0, 0), (0, Ep - E)))                           # (1, Ep) f32
    w_att_row = jnp.pad(w_att.reshape(1, E).astype(jnp.float32),
                        ((0, 0), (0, Ep - E)))                           # (1, Ep) f32

    # Conservative VMEM budget -> explicit limit (matters on v5e/v7x).
    in_bytes = jnp.dtype(in_dtype).itemsize
    out_bytes = jnp.dtype(out_dtype).itemsize
    vmem_bytes = (
        2 * bt * Rp * Fp * in_bytes        # x block (double-buffered)
        + 2 * bt * Rp * Ep * out_bytes     # images_embedded block
        + 2 * bt * Ep * out_bytes          # v_mean block
        + 2 * Fp * Ep * in_bytes           # resident weight (worst case 2 bufs)
        + 4 * Ep * 4                       # bias / attention rows
        + 3 * bt * Rp * Ep * 4             # f32 intermediates
    )
    vmem_limit = int(min(max(2 * vmem_bytes, 16 << 20), 64 << 20))

    kernel = functools.partial(_image_embedding_kernel, num_regions=R)

    def run(single_buffer_weights):
        # Constant index_map keeps the weights resident across grid steps;
        # single-buffering halves their VMEM footprint (double-buffering a
        # never-changing block is pure waste).
        resident = {}
        if single_buffer_weights and hasattr(pl, "Buffered"):
            resident = dict(pipeline_mode=pl.Buffered(1))
        return pl.pallas_call(
            kernel,
            out_shape=(
                jax.ShapeDtypeStruct((B_pad, Rp, Ep), out_dtype),
                jax.ShapeDtypeStruct((B_pad, 1, Ep), out_dtype),
            ),
            grid=(num_blocks,),
            in_specs=[
                pl.BlockSpec((bt, Rp, Fp), lambda b: (b, 0, 0)),
                pl.BlockSpec((Fp, Ep), lambda b: (0, 0), **resident),
                pl.BlockSpec((1, Ep), lambda b: (0, 0), **resident),
                pl.BlockSpec((1, Ep), lambda b: (0, 0), **resident),
            ],
            out_specs=(
                pl.BlockSpec((bt, Rp, Ep), lambda b: (b, 0, 0)),
                pl.BlockSpec((bt, 1, Ep), lambda b: (b, 0, 0)),
            ),
            compiler_params=pltpu.CompilerParams(
                dimension_semantics=("parallel",),   # batch blocks independent
                vmem_limit_bytes=vmem_limit,
            ),
        )(x, w_emb_t, b_emb_row, w_att_row)

    try:
        emb_out, vmean_out = run(True)
    except Exception:  # fallback if Buffered(1) is rejected by this jax build
        emb_out, vmean_out = run(False)

    images_embedded = emb_out[:B, :R, :E]
    v_mean_embedded = vmean_out[:B, 0, :E]
    return images_embedded, v_mean_embedded


def _reference_forward(x, w_emb, b_emb, w_att, b_att):
    """Pure-JAX reference matching the PyTorch module exactly."""
    emb = jnp.einsum("brf,ef->bre", x, w_emb) + b_emb            # nn.Linear
    logits = jnp.einsum("bre,oe->bro", emb, w_att) + b_att       # (B, R, 1)
    p = jax.nn.softmax(logits, axis=1)
    pooled = jnp.sum(p * emb, axis=1)                            # (B, E)
    norm = jnp.sqrt(jnp.sum(pooled * pooled, axis=1, keepdims=True))
    return emb, pooled / norm


# TODO(synk): enable_fine_tuning only toggles requires_grad (training-time flag);
# it has no forward-pass equivalent to port.

if __name__ == "__main__":
    def check(B, R, F, E):
        key = jax.random.PRNGKey(0)
        kx, kw1, kb1, kw2, kb2 = jax.random.split(key, 5)
        x = jax.random.normal(kx, (B, R, F), dtype=jnp.float32)
        w_emb = jax.random.normal(kw1, (E, F), dtype=jnp.float32) * 0.1
        b_emb = jax.random.normal(kb1, (E,), dtype=jnp.float32) * 0.1
        w_att = jax.random.normal(kw2, (1, E), dtype=jnp.float32) * 0.1
        b_att = jax.random.normal(kb2, (1,), dtype=jnp.float32) * 0.1

        emb, v_mean = image_embedding_forward(x, w_emb, b_emb, w_att, b_att)
        emb = jax.block_until_ready(emb)
        v_mean = jax.block_until_ready(v_mean)

        ref_emb, ref_v = _reference_forward(x, w_emb, b_emb, w_att, b_att)
        assert jnp.allclose(emb, ref_emb, rtol=1e-5, atol=1e-5)
        assert jnp.allclose(v_mean, ref_v, rtol=1e-5, atol=1e-5)

    # batch=2, regions=8, image_features_size=32, joint_embeddings_size=32
    check(B=2, R=8, F=32, E=32)
    # un-aligned shapes exercise host-side padding + the in-kernel region mask
    check(B=3, R=12, F=48, E=40)

    print("KERNEL_OK")
</pallas_src>

<mosaic_0001>
module attributes {stable_mosaic.version = 11 : i64} {
  func.func @_image_embedding_kernel(%arg0: i32, %arg1: memref<2x8x128xf32, #tpu.memory_space<vmem>>, %arg2: memref<128x128xf32, #tpu.memory_space<vmem>>, %arg3: memref<1x128xf32, #tpu.memory_space<vmem>>, %arg4: memref<1x128xf32, #tpu.memory_space<vmem>>, %arg5: memref<2x8x128xf32, #tpu.memory_space<vmem>>, %arg6: memref<2x1x128xf32, #tpu.memory_space<vmem>>) attributes {dimension_semantics = [#tpu.dimension_semantics<parallel>], iteration_bounds = array<i64: 1>, scalar_prefetch = 0 : i64, scratch_operands = 0 : i64, tpu.core_type = #tpu.core_type<tc>, window_params = [{transform_indices = @transform_0, window_bounds = array<i64: 2, 8, 128>}, {pipeline_mode = #tpu.pipeline_mode<synchronous>, transform_indices = @transform_1, window_bounds = array<i64: 128, 128>}, {pipeline_mode = #tpu.pipeline_mode<synchronous>, transform_indices = @transform_2, window_bounds = array<i64: 1, 128>}, {pipeline_mode = #tpu.pipeline_mode<synchronous>, transform_indices = @transform_3, window_bounds = array<i64: 1, 128>}, {transform_indices = @transform_4, window_bounds = array<i64: 2, 8, 128>}, {transform_indices = @transform_5, window_bounds = array<i64: 2, 1, 128>}]} {
    %c0 = arith.constant 0 : index
    %c0_0 = arith.constant 0 : index
    %c0_1 = arith.constant 0 : index
    %0 = vector.load %arg1[%c0, %c0_0, %c0_1] : memref<2x8x128xf32, #tpu.memory_space<vmem>>, vector<2x8x128xf32>
    %1 = vector.shape_cast %0 : vector<2x8x128xf32> to vector<16x128xf32>
    %c0_2 = arith.constant 0 : index
    %c0_3 = arith.constant 0 : index
    %2 = vector.load %arg2[%c0_2, %c0_3] : memref<128x128xf32, #tpu.memory_space<vmem>>, vector<128x128xf32>
    %cst = arith.constant dense<0.000000e+00> : vector<16x128xf32>
    %3 = tpu.matmul %1, %2, %cst {dimension_numbers = #tpu.dot_dimension_numbers<[1], [0], [0], [1], [0, 0, 1, 1], [], []>} : vector<16x128xf32>, vector<128x128xf32>, vector<16x128xf32> -> vector<16x128xf32>
    %c0_4 = arith.constant 0 : index
    %c0_5 = arith.constant 0 : index
    %4 = vector.load %arg3[%c0_4, %c0_5] : memref<1x128xf32, #tpu.memory_space<vmem>>, vector<1x128xf32>
    %5 = vector.broadcast %4 : vector<1x128xf32> to vector<16x128xf32>
    %6 = arith.addf %3, %5 : vector<16x128xf32>
    %7 = vector.shape_cast %6 : vector<16x128xf32> to vector<2x8x128xf32>
    %c0_6 = arith.constant 0 : index
    %c0_7 = arith.constant 0 : index
    %8 = vector.load %arg4[%c0_6, %c0_7] : memref<1x128xf32, #tpu.memory_space<vmem>>, vector<1x128xf32>
    %9 = vector.shape_cast %8 : vector<1x128xf32> to vector<1x1x128xf32>
    %10 = vector.broadcast %9 : vector<1x1x128xf32> to vector<2x8x128xf32>
    %11 = arith.mulf %7, %10 : vector<2x8x128xf32>
    %cst_8 = arith.constant dense<0.000000e+00> : vector<2x8xf32>
    %12 = vector.multi_reduction <add>, %11, %cst_8 [2] : vector<2x8x128xf32> to vector<2x8xf32>
    %13 = vector.shape_cast %12 : vector<2x8xf32> to vector<2x8x1xf32>
    %cst_9 = arith.constant dense<0xFF800000> : vector<2x1xf32>
    %14 = vector.multi_reduction <maximumf>, %13, %cst_9 [1] : vector<2x8x1xf32> to vector<2x1xf32>
    %15 = vector.shape_cast %14 : vector<2x1xf32> to vector<2x1x1xf32>
    %16 = vector.broadcast %15 : vector<2x1x1xf32> to vector<2x8x1xf32>
    %17 = arith.subf %13, %16 : vector<2x8x1xf32>
    %18 = math.exp %17 : vector<2x8x1xf32>
    %cst_10 = arith.constant dense<0.000000e+00> : vector<2x1xf32>
    %19 = vector.multi_reduction <add>, %18, %cst_10 [1] : vector<2x8x1xf32> to vector<2x1xf32>
    %20 = vector.shape_cast %19 : vector<2x1xf32> to vector<2x1x1xf32>
    %21 = tpu.reciprocal %20 : vector<2x1x1xf32> -> vector<2x1x1xf32>
    %22 = vector.broadcast %21 : vector<2x1x1xf32> to vector<2x8x1xf32>
    %23 = arith.mulf %18, %22 : vector<2x8x1xf32>
    %24 = vector.broadcast %23 : vector<2x8x1xf32> to vector<2x8x128xf32>
    %25 = arith.mulf %24, %7 : vector<2x8x128xf32>
    %cst_11 = arith.constant dense<0.000000e+00> : vector<2x128xf32>
    %26 = vector.multi_reduction <add>, %25, %cst_11 [1] : vector<2x8x128xf32> to vector<2x128xf32>
    %27 = vector.shape_cast %26 : vector<2x128xf32> to vector<2x1x128xf32>
    %28 = arith.mulf %27, %27 : vector<2x1x128xf32>
    %cst_12 = arith.constant dense<0.000000e+00> : vector<2x1xf32>
    %29 = vector.multi_reduction <add>, %28, %cst_12 [2] : vector<2x1x128xf32> to vector<2x1xf32>
    %30 = vector.shape_cast %29 : vector<2x1xf32> to vector<2x1x1xf32>
    %31 = math.rsqrt %30 : vector<2x1x1xf32>
    %32 = vector.broadcast %31 : vector<2x1x1xf32> to vector<2x1x128xf32>
    %33 = arith.mulf %27, %32 : vector<2x1x128xf32>
    %c0_13 = arith.constant 0 : index
    %c0_14 = arith.constant 0 : index
    %c0_15 = arith.constant 0 : index
    %34 = vector.load %arg5[%c0_13, %c0_14, %c0_15] : memref<2x8x128xf32, #tpu.memory_space<vmem>>, vector<2x8x128xf32>
    tpu.vector_store %arg5[%c0_13, %c0_14, %c0_15], %7 {strides = array<i32>} : memref<2x8x128xf32, #tpu.memory_space<vmem>>, vector<2x8x128xf32>,
    %c0_16 = arith.constant 0 : index
    %c0_17 = arith.constant 0 : index
    %c0_18 = arith.constant 0 : index
    %35 = vector.load %arg6[%c0_16, %c0_17, %c0_18] : memref<2x1x128xf32, #tpu.memory_space<vmem>>, vector<2x1x128xf32>
    tpu.vector_store %arg6[%c0_16, %c0_17, %c0_18], %33 {strides = array<i32>} : memref<2x1x128xf32, #tpu.memory_space<vmem>>, vector<2x1x128xf32>,
    return
  }
  func.func @transform_0(%arg0: i32) -> (i32, i32, i32) {
    %c0_i32 = arith.constant 0 : i32
    %c0_i32_0 = arith.constant 0 : i32
    %c0_i32_1 = arith.constant 0 : i32
    return %arg0, %c0_i32, %c0_i32_0 : i32, i32, i32
  }
  func.func @transform_1(%arg0: i32) -> (i32, i32) {
    %c0_i32 = arith.constant 0 : i32
    %c0_i32_0 = arith.constant 0 : i32
    %c0_i32_1 = arith.constant 0 : i32
    return %c0_i32, %c0_i32_0 : i32, i32
  }
  func.func @transform_2(%arg0: i32) -> (i32, i32) {
    %c0_i32 = arith.constant 0 : i32
    %c0_i32_0 = arith.constant 0 : i32
    %c0_i32_1 = arith.constant 0 : i32
    return %c0_i32, %c0_i32_0 : i32, i32
  }
  func.func @transform_3(%arg0: i32) -> (i32, i32) {
    %c0_i32 = arith.constant 0 : i32
    %c0_i32_0 = arith.constant 0 : i32
    %c0_i32_1 = arith.constant 0 : i32
    return %c0_i32, %c0_i32_0 : i32, i32
  }
  func.func @transform_4(%arg0: i32) -> (i32, i32, i32) {
    %c0_i32 = arith.constant 0 : i32
    %c0_i32_0 = arith.constant 0 : i32
    %c0_i32_1 = arith.constant 0 : i32
    return %arg0, %c0_i32, %c0_i32_0 : i32, i32, i32
  }
  func.func @transform_5(%arg0: i32) -> (i32, i32, i32) {
    %c0_i32 = arith.constant 0 : i32
    %c0_i32_0 = arith.constant 0 : i32
    %c0_i32_1 = arith.constant 0 : i32
    return %arg0, %c0_i32, %c0_i32_0 : i32, i32, i32
  }
}

module attributes {stable_mosaic.version = 11 : i64} {
  func.func @_image_embedding_kernel(%arg0: i32, %arg1: memref<2x8x128xf32, #tpu.memory_space<vmem>>, %arg2: memref<128x128xf32, #tpu.memory_space<vmem>>, %arg3: memref<1x128xf32, #tpu.memory_space<vmem>>, %arg4: memref<1x128xf32, #tpu.memory_space<vmem>>, %arg5: memref<2x8x128xf32, #tpu.memory_space<vmem>>, %arg6: memref<2x1x128xf32, #tpu.memory_space<vmem>>) attributes {dimension_semantics = [#tpu.dimension_semantics<parallel>], iteration_bounds = array<i64: 1>, scalar_prefetch = 0 : i64, scratch_operands = 0 : i64, tpu.core_type = #tpu.core_type<tc>, window_params = [{transform_indices = @transform_0, window_bounds = array<i64: 2, 8, 128>}, {pipeline_mode = #tpu.pipeline_mode<synchronous>, transform_indices = @transform_1, window_bounds = array<i64: 128, 128>}, {pipeline_mode = #tpu.pipeline_mode<synchronous>, transform_indices = @transform_2, window_bounds = array<i64: 1, 128>}, {pipeline_mode = #tpu.pipeline_mode<synchronous>, transform_indices = @transform_3, window_bounds = array<i64: 1, 128>}, {transform_indices = @transform_4, window_bounds = array<i64: 2, 8, 128>}, {transform_indices = @transform_5, window_bounds = array<i64: 2, 1, 128>}]} {
    %c0 = arith.constant 0 : index
    %c0_0 = arith.constant 0 : index
    %c0_1 = arith.constant 0 : index
    %0 = vector.load %arg1[%c0, %c0_0, %c0_1] : memref<2x8x128xf32, #tpu.memory_space<vmem>>, vector<2x8x128xf32>
    %1 = vector.shape_cast %0 : vector<2x8x128xf32> to vector<16x128xf32>
    %c0_2 = arith.constant 0 : index
    %c0_3 = arith.constant 0 : index
    %2 = vector.load %arg2[%c0_2, %c0_3] : memref<128x128xf32, #tpu.memory_space<vmem>>, vector<128x128xf32>
    %cst = arith.constant dense<0.000000e+00> : vector<16x128xf32>
    %3 = tpu.matmul %1, %2, %cst {dimension_numbers = #tpu.dot_dimension_numbers<[1], [0], [0], [1], [0, 0, 1, 1], [], []>} : vector<16x128xf32>, vector<128x128xf32>, vector<16x128xf32> -> vector<16x128xf32>
    %c0_4 = arith.constant 0 : index
    %c0_5 = arith.constant 0 : index
    %4 = vector.load %arg3[%c0_4, %c0_5] : memref<1x128xf32, #tpu.memory_space<vmem>>, vector<1x128xf32>
    %5 = vector.broadcast %4 : vector<1x128xf32> to vector<16x128xf32>
    %6 = arith.addf %3, %5 : vector<16x128xf32>
    %7 = vector.shape_cast %6 : vector<16x128xf32> to vector<2x8x128xf32>
    %c0_6 = arith.constant 0 : index
    %c0_7 = arith.constant 0 : index
    %8 = vector.load %arg4[%c0_6, %c0_7] : memref<1x128xf32, #tpu.memory_space<vmem>>, vector<1x128xf32>
    %9 = vector.shape_cast %8 : vector<1x128xf32> to vector<1x1x128xf32>
    %10 = vector.broadcast %9 : vector<1x1x128xf32> to vector<2x8x128xf32>
    %11 = arith.mulf %7, %10 : vector<2x8x128xf32>
    %cst_8 = arith.constant dense<0.000000e+00> : vector<2x8xf32>
    %12 = vector.multi_reduction <add>, %11, %cst_8 [2] : vector<2x8x128xf32> to vector<2x8xf32>
    %13 = vector.shape_cast %12 : vector<2x8xf32> to vector<2x8x1xf32>
    %cst_9 = arith.constant dense<0xFF800000> : vector<2x1xf32>
    %14 = vector.multi_reduction <maximumf>, %13, %cst_9 [1] : vector<2x8x1xf32> to vector<2x1xf32>
    %15 = vector.shape_cast %14 : vector<2x1xf32> to vector<2x1x1xf32>
    %16 = vector.broadcast %15 : vector<2x1x1xf32> to vector<2x8x1xf32>
    %17 = arith.subf %13, %16 : vector<2x8x1xf32>
    %18 = math.exp %17 : vector<2x8x1xf32>
    %cst_10 = arith.constant dense<0.000000e+00> : vector<2x1xf32>
    %19 = vector.multi_reduction <add>, %18, %cst_10 [1] : vector<2x8x1xf32> to vector<2x1xf32>
    %20 = vector.shape_cast %19 : vector<2x1xf32> to vector<2x1x1xf32>
    %21 = tpu.reciprocal %20 : vector<2x1x1xf32> -> vector<2x1x1xf32>
    %22 = vector.broadcast %21 : vector<2x1x1xf32> to vector<2x8x1xf32>
    %23 = arith.mulf %18, %22 : vector<2x8x1xf32>
    %24 = vector.broadcast %23 : vector<2x8x1xf32> to vector<2x8x128xf32>
    %25 = arith.mulf %24, %7 : vector<2x8x128xf32>
    %cst_11 = arith.constant dense<0.000000e+00> : vector<2x128xf32>
    %26 = vector.multi_reduction <add>, %25, %cst_11 [1] : vector<2x8x128xf32> to vector<2x128xf32>
    %27 = vector.shape_cast %26 : vector<2x128xf32> to vector<2x1x128xf32>
    %28 = arith.mulf %27, %27 : vector<2x1x128xf32>
    %cst_12 = arith.constant dense<0.000000e+00> : vector<2x1xf32>
    %29 = vector.multi_reduction <add>, %28, %cst_12 [2] : vector<2x1x128xf32> to vector<2x1xf32>
    %30 = vector.shape_cast %29 : vector<2x1xf32> to vector<2x1x1xf32>
    %31 = math.rsqrt %30 : vector<2x1x1xf32>
    %32 = vector.broadcast %31 : vector<2x1x1xf32> to vector<2x1x128xf32>
    %33 = arith.mulf %27, %32 : vector<2x1x128xf32>
    %c0_13 = arith.constant 0 : index
    %c0_14 = arith.constant 0 : index
    %c0_15 = arith.constant 0 : index
    %34 = vector.load %arg5[%c0_13, %c0_14, %c0_15] : memref<2x8x128xf32, #tpu.memory_space<vmem>>, vector<2x8x128xf32>
    tpu.vector_store %arg5[%c0_13, %c0_14, %c0_15], %7 {strides = array<i32>} : memref<2x8x128xf32, #tpu.memory_space<vmem>>, vector<2x8x128xf32>,
    %c0_16 = arith.constant 0 : index
    %c0_17 = arith.constant 0 : index
    %c0_18 = arith.constant 0 : index
    %35 = vector.load %arg6[%c0_16, %c0_17, %c0_18] : memref<2x1x128xf32, #tpu.memory_space<vmem>>, vector<2x1x128xf32>
    tpu.vector_store %arg6[%c0_16, %c0_17, %c0_18], %33 {strides = array<i32>} : memref<2x1x128xf32, #tpu.memory_space<vmem>>, vector<2x1x128xf32>,
    return
  }
  func.func @transform_0(%arg0: i32) -> (i32, i32, i32) {
    %c0_i32 = arith.constant 0 : i32
    %c0_i32_0 = arith.constant 0 : i32
    %c0_i32_1 = arith.constant 0 : i32
    return %arg0, %c0_i32, %c0_i32_0 : i32, i32, i32
  }
  func.func @transform_1(%arg0: i32) -> (i32, i32) {
    %c0_i32 = arith.constant 0 : i32
    %c0_i32_0 = arith.constant 0 : i32
    %c0_i32_1 = arith.constant 0 : i32
    return %c0_i32, %c0_i32_0 : i32, i32
  }
  func.func @transform_2(%arg0: i32) -> (i32, i32) {
    %c0_i32 = arith.constant 0 : i32
    %c0_i32_0 = arith.constant 0 : i32
    %c0_i32_1 = arith.constant 0 : i32
    return %c0_i32, %c0_i32_0 : i32, i32
  }
  func.func @transform_3(%arg0: i32) -> (i32, i32) {
    %c0_i32 = arith.constant 0 : i32
    %c0_i32_0 = arith.constant 0 : i32
    %c0_i32_1 = arith.constant 0 : i32
    return %c0_i32, %c0_i32_0 : i32, i32
  }
  func.func @transform_4(%arg0: i32) -> (i32, i32, i32) {
    %c0_i32 = arith.constant 0 : i32
    %c0_i32_0 = arith.constant 0 : i32
    %c0_i32_1 = arith.constant 0 : i32
    return %arg0, %c0_i32, %c0_i32_0 : i32, i32, i32
  }
  func.func @transform_5(%arg0: i32) -> (i32, i32, i32) {
    %c0_i32 = arith.constant 0 : i32
    %c0_i32_0 = arith.constant 0 : i32
    %c0_i32_1 = arith.constant 0 : i32
    return %arg0, %c0_i32, %c0_i32_0 : i32, i32, i32
  }
}

</mosaic_0001>

<llo_original>
// kernel: tpu_custom_call.1
$region0: #{tpu_custom_call.1}
  #allocation0 [shape = 'u32[]', space=smem, size = 0x4, offset = 0x4, fixed_abs, tag = 'smem constant byte address 0x4 - core index']
  #allocation1 [shape = 'u32[144,128]{1,0:T(1,128)}', space=vmem, size = 0x12000, scoped, tag = 'internal scratch']
  %s0 = inlined_call_operand.hbm [shape: f32[2,8,128], index: 0, kind: input, shape index: {}]
  %s1 = inlined_call_operand.hbm [shape: f32[128,128], index: 1, kind: input, shape index: {}]
  %s2 = inlined_call_operand.vmem [shape: f32[1,128], index: 2, kind: input, shape index: {}]
  %s3 = inlined_call_operand.vmem [shape: f32[1,128], index: 3, kind: input, shape index: {}]
  %s4 = inlined_call_operand.hbm [shape: f32[2,8,128], index: 4, kind: output, shape index: {0}]
  %s5 = inlined_call_operand.hbm [shape: f32[2,1,128], index: 5, kind: output, shape index: {1}]
  %6 = xla_tuple %s4, %s5
  %s7 = sld [smem:[#allocation0]]
  $region42: #{tpu_custom_call.1} parent=0
    _
  %s9 = ssub.s32 1, %s7
  %s10 = scalar_select 0, %s9, %s7
  $region1: #{tpu_custom_call.1} parent=0
    #allocation2 [shape = 'u8[8192]{0}', space=vmem, size = 0x2000, scoped, tag = 'input window, operand 0, single buffered']
    #allocation3 [shape = 's32[1]{0}', space=sflag, size = 0x4, scoped, tag = 'scoped memory for tpu_custom_call.1']
    #allocation4 [shape = 's32[1]{0}', space=sflag, size = 0x4, scoped, tag = 'scoped memory for tpu_custom_call.1']
    #allocation5 [shape = 'u8[65536]{0}', space=vmem, size = 0x10000, scoped, tag = 'input window, operand 1, single buffered']
    #allocation6 [shape = 's32[1]{0}', space=sflag, size = 0x4, scoped, tag = 'scoped memory for tpu_custom_call.1']
    #allocation7 [shape = 'u8[8192]{0}', space=vmem, size = 0x2000, scoped, tag = 'output window, operand 0, single buffered']
    #allocation8 [shape = 'u8[1024]{0}', space=vmem, size = 0x400, scoped, tag = 'output window, operand 1, single buffered']
    #allocation9 [shape = 's32[1]{0}', space=sflag, size = 0x4, scoped, tag = 'scoped memory for tpu_custom_call.1']
    %11 = vsyncpa [#allocation3], 0
    %12 = vsyncpa [#allocation6], 0
    %13 = vsyncpa [#allocation4], 0
    %14 = vsyncpa [#allocation9], 0
    // Predicated region
    $region2: #{tpu_custom_call.1} parent=1 // pred_check
      _
    $region3: #{tpu_custom_call.1} parent=1 // pred_check_branch
      %16 = sbr.rel (0) target = $region5
    $region4: #{tpu_custom_call.1} parent=1 // pred_region
      %s18 = ssub.s32 256, 256
      %19 = vsyncadd [#allocation3], %s18
      %s20 = sshll.u32 [#allocation2], 4
      %s21 = int_to_ptr.vmem [resolvable:$true] %s20
      %26 = dma.hbm_to_vmem [thread:$0]  %s0, 256, %s21, [#allocation3], 128, 128, 8
    $region5: #{tpu_custom_call.1} parent=1 // pred_fallthru
      _
    // Predicated region
    $region6: #{tpu_custom_call.1} parent=1 // pred_check
      _
    $region7: #{tpu_custom_call.1} parent=1 // pred_check_branch
      %28 = sbr.rel (0) target = $region9
    $region8: #{tpu_custom_call.1} parent=1 // pred_region
      %s30 = ssub.s32 2048, 2048
      %31 = vsyncadd [#allocation6], %s30
      %s32 = sshll.u32 [#allocation5], 4
      %s33 = int_to_ptr.vmem [resolvable:$true] %s32
      %38 = dma.hbm_to_vmem [thread:$0]  %s1, 2048, %s33, [#allocation6], 128, 128, 8
    $region9: #{tpu_custom_call.1} parent=1 // pred_fallthru
      _
    // Predicated region
    $region10: #{tpu_custom_call.1} parent=1 // pred_check
      _
    $region11: #{tpu_custom_call.1} parent=1 // pred_check_branch
      %40 = sbr.rel (0) target = $region13
    $region12: #{tpu_custom_call.1} parent=1 // pred_region
      _
    $region13: #{tpu_custom_call.1} parent=1 // pred_fallthru
      _
    // Predicated region
    $region14: #{tpu_custom_call.1} parent=1 // pred_check
      _
    $region15: #{tpu_custom_call.1} parent=1 // pred_check_branch
      %42 = sbr.rel (0) target = $region17
    $region16: #{tpu_custom_call.1} parent=1 // pred_region
      _
    $region17: #{tpu_custom_call.1} parent=1 // pred_fallthru
      _
    // Predicated region
    $region18: #{tpu_custom_call.1} parent=1 // pred_check
      _
    $region19: #{tpu_custom_call.1} parent=1 // pred_check_branch
      %44 = sbr.rel (0) target = $region21
    $region20: #{tpu_custom_call.1} parent=1 // pred_region
      %45 = dma.done [#allocation3], 256
    $region21: #{tpu_custom_call.1} parent=1 // pred_fallthru
      _
    // Predicated region
    $region22: #{tpu_custom_call.1} parent=1 // pred_check
      _
    $region23: #{tpu_custom_call.1} parent=1 // pred_check_branch
      %47 = sbr.rel (0) target = $region25
    $region24: #{tpu_custom_call.1} parent=1 // pred_region
      %48 = dma.done [#allocation6], 2048
    $region25: #{tpu_custom_call.1} parent=1 // pred_fallthru
      _
    %v49 = vld [vmem:[#allocation2] sm:$0xff]
    %v50 = vld [vmem:[#allocation2 + $0x8] sm:$0xff]
    %v51 = vld [vmem:[#allocation5] sm:$0xff]
    %v52 = vld [vmem:[#allocation5 + $0x8] sm:$0xff]
    %v53 = vld [vmem:[#allocation5 + $0x10] sm:$0xff]
    %v54 = vld [vmem:[#allocation5 + $0x18] sm:$0xff]
    %v55 = vld [vmem:[#allocation5 + $0x20] sm:$0xff]
    %v56 = vld [vmem:[#allocation5 + $0x28] sm:$0xff]
    %v57 = vld [vmem:[#allocation5 + $0x30] sm:$0xff]
    %v58 = vld [vmem:[#allocation5 + $0x38] sm:$0xff]
    %v59 = vld [vmem:[#allocation5 + $0x40] sm:$0xff]
    %v60 = vld [vmem:[#allocation5 + $0x48] sm:$0xff]
    %v61 = vld [vmem:[#allocation5 + $0x50] sm:$0xff]
    %v62 = vld [vmem:[#allocation5 + $0x58] sm:$0xff]
    %v63 = vld [vmem:[#allocation5 + $0x60] sm:$0xff]
    %v64 = vld [vmem:[#allocation5 + $0x68] sm:$0xff]
    %v65 = vld [vmem:[#allocation5 + $0x70] sm:$0xff]
    %v66 = vld [vmem:[#allocation5 + $0x78] sm:$0xff]
    %v67 = vld [vmem:[%s2] sm:$0x1]
    %v69 = vlaneseq
    %v70 = vshrl.u32 %v69, 7
    %v71 = vsub.s32 0, %v70
    %v72 = vrot.slane %v67, %v71
    %74 = vmatprep.subr.mxu0 0.0
    %75 = vmatpush1.msra.mxu0 %v66
    %76 = vmatprep.subr.mxu0 0.0
    %77 = vmatpush1.msra.mxu0 %v65
    %78 = vmatprep.subr.mxu0 0.0
    %79 = vmatpush1.msra.mxu0 %v64
    %80 = vmatprep.subr.mxu0 0.0
    %81 = vmatpush1.msra.mxu0 %v63
    %82 = vmatprep.subr.mxu0 0.0
    %83 = vmatpush1.msra.mxu0 %v62
    %84 = vmatprep.subr.mxu0 0.0
    %85 = vmatpush1.msra.mxu0 %v61
    %86 = vmatprep.subr.mxu0 0.0
    %87 = vmatpush1.msra.mxu0 %v60
    %88 = vmatprep.subr.mxu0 0.0
    %89 = vmatpush1.msra.mxu0 %v59
    %90 = vmatprep.subr.mxu0 0.0
    %91 = vmatpush1.msra.mxu0 %v58
    %92 = vmatprep.subr.mxu0 0.0
    %93 = vmatpush1.msra.mxu0 %v57
    %94 = vmatprep.subr.mxu0 0.0
    %95 = vmatpush1.msra.mxu0 %v56
    %96 = vmatprep.subr.mxu0 0.0
    %97 = vmatpush1.msra.mxu0 %v55
    %98 = vmatprep.subr.mxu0 0.0
    %99 = vmatpush1.msra.mxu0 %v54
    %100 = vmatprep.subr.mxu0 0.0
    %101 = vmatpush1.msra.mxu0 %v53
    %102 = vmatprep.subr.mxu0 0.0
    %103 = vmatpush1.msra.mxu0 %v52
    %104 = vmatprep.subr.mxu0 0.0
    %105 = vmatpush1.msra.mxu0 %v51
    %106 = vmatprep.subr.mxu0 0.0
    %107 = vmatpush2.msra.mxu0 0.0
    %108 = vmatprep.subr.mxu0 0.0
    %109 = vmatpush2.msra.mxu0 0.0
    %110 = vmatprep.subr.mxu0 0.0
    %111 = vmatpush2.msra.mxu0 0.0
    %112 = vmatprep.subr.mxu0 0.0
    %113 = vmatpush2.msra.mxu0 0.0
    %114 = vmatprep.subr.mxu0 0.0
    %115 = vmatpush2.msra.mxu0 0.0
    %116 = vmatprep.subr.mxu0 0.0
    %117 = vmatpush2.msra.mxu0 0.0
    %118 = vmatprep.subr.mxu0 0.0
    %119 = vmatpush2.msra.mxu0 0.0
    %120 = vmatprep.subr.mxu0 0.0
    %121 = vmatpush2.msra.mxu0 0.0
    %122 = vmatprep.subr.mxu0 0.0
    %123 = vmatpush2.msra.mxu0 0.0
    %124 = vmatprep.subr.mxu0 0.0
    %125 = vmatpush2.msra.mxu0 0.0
    %126 = vmatprep.subr.mxu0 0.0
    %127 = vmatpush2.msra.mxu0 0.0
    %128 = vmatprep.subr.mxu0 0.0
    %129 = vmatpush2.msra.mxu0 0.0
    %130 = vmatprep.subr.mxu0 0.0
    %131 = vmatpush2.msra.mxu0 0.0
    %132 = vmatprep.subr.mxu0 0.0
    %133 = vmatpush2.msra.mxu0 0.0
    %134 = vmatprep.subr.mxu0 0.0
    %135 = vmatpush2.msra.mxu0 0.0
    %136 = vmatprep.subr.mxu0 0.0
    %137 = vmatpush2.msra.mxu0 0.0
    %138 = vmatprep.mubr.f32.mxu0 0.0
    %139 = vmatmul.mubr.f32.gmra.mxu0 %v49
    %v140 = vpop.f32.mrf.mxu0
    %v141 = vadd.f32 %v72, %v140
    %v142 = vpop.f32.mrf.mxu0
    %143 = vmatprep.mubr.f32.mxu0 0.0
    %144 = vmatmul.mubr.f32.gmra.mxu0 %v50
    %v145 = vpop.f32.mrf.mxu0
    %v146 = vadd.f32 %v72, %v145
    %v147 = vpop.f32.mrf.mxu0
    %148 = vdwg.mxu0
    %v149 = vld [vmem:[%s3] sm:$0x1]
    %v151 = vlaneseq
    %v152 = vshrl.u32 %v151, 7
    %v153 = vsub.s32 0, %v152
    %v154 = vrot.slane %v149, %v153
    %v156 = vmul.f32 %v141, %v154
    %v157 = vmul.f32 %v146, %v154
    %158 = vadd.xlane.f32.xlu0 %v156
    %v159 = vpop.xlane.xlu0 %158
    %160 = vadd.xlane.f32.xlu0 %v157
    %v161 = vpop.xlane.xlu0 %160
    %v162 = vrot.slane %v159, 4
    %v163 = vmax.f32 %v159, %v162
    %v164 = vrot.slane %v163, 2
    %v165 = vmax.f32 %v163, %v164
    %v166 = vrot.slane %v165, 1
    %v167 = vmax.f32 %v165, %v166
    %v168 = vrot.slane %v161, 4
    %v169 = vmax.f32 %v161, %v168
    %v170 = vrot.slane %v169, 2
    %v171 = vmax.f32 %v169, %v170
    %v172 = vrot.slane %v171, 1
    %v173 = vmax.f32 %v171, %v172
    %v174 = vsub.f32 %v159, %v167
    %v175 = vsub.f32 %v161, %v173
    %v176 = vmul.f32 %v174, 1.442695
    %v177 = vpow.pop %v176
    %v178 = vmul.f32 %v175, 1.442695
    %v179 = vpow.pop %v178
    %v180 = vrot.slane %v177, 4
    %v181 = vadd.f32 %v177, %v180
    %v182 = vrot.slane %v181, 2
    %v183 = vadd.f32 %v181, %v182
    %v184 = vrot.slane %v183, 1
    %v185 = vadd.f32 %v183, %v184
    %v186 = vrot.slane %v179, 4
    %v187 = vadd.f32 %v179, %v186
    %v188 = vrot.slane %v187, 2
    %v189 = vadd.f32 %v187, %v188
    %v190 = vrot.slane %v189, 1
    %v191 = vadd.f32 %v189, %v190
    %v192 = vrcp.pop %v185
    %v193 = vrcp.pop %v191
    %v194 = vmul.f32 %v177, %v192
    %v195 = vmul.f32 %v179, %v193
    %v196 = vmul.f32 %v194, %v141
    %v197 = vmul.f32 %v195, %v146
    %v198 = vrot.slane %v196, 4
    %v199 = vadd.f32 %v196, %v198
    %v200 = vrot.slane %v199, 2
    %v201 = vadd.f32 %v199, %v200
    %v202 = vrot.slane %v201, 1
    %v203 = vadd.f32 %v201, %v202
    %v204 = vrot.slane %v197, 4
    %v205 = vadd.f32 %v197, %v204
    %v206 = vrot.slane %v205, 2
    %v207 = vadd.f32 %v205, %v206
    %v208 = vrot.slane %v207, 1
    %v209 = vadd.f32 %v207, %v208
    %v210 = vmul.f32 %v203, %v203
    %v211 = vmul.f32 %v209, %v209
    %212 = vadd.xlane.f32.xlu0 %v210
    %v213 = vpop.xlane.xlu0 %212
    %214 = vadd.xlane.f32.xlu0 %v211
    %v215 = vpop.xlane.xlu0 %214
    %v216 = vrsqrt.pop %v213
    %v217 = vrsqrt.pop %v215
    %v218 = vmul.f32 %v203, %v216
    %v219 = vmul.f32 %v209, %v217
    %220 = vst [vmem:[#allocation7] sm:$0xff] %v141
    %221 = vst [vmem:[#allocation7 + $0x8] sm:$0xff] %v146
    %222 = vst [vmem:[#allocation8] sm:$0x1] %v218
    %223 = vst [vmem:[#allocation8 + $0x1] sm:$0x1] %v219
    // Predicated region
    $region26: #{tpu_custom_call.1} parent=1 // pred_check
      _
    $region27: #{tpu_custom_call.1} parent=1 // pred_check_branch
      %225 = sbr.rel (0) target = $region29
    $region28: #{tpu_custom_call.1} parent=1 // pred_region
      %s227 = ssub.s32 256, 256
      %228 = vsyncadd [#allocation4], %s227
      %s229 = sshll.u32 [#allocation7], 4
      %s230 = int_to_ptr.vmem [resolvable:$true] %s229
      %235 = dma.vmem_to_hbm [thread:$0]  %s230, 256, %s4, [#allocation4], 128, 128, 8
    $region29: #{tpu_custom_call.1} parent=1 // pred_fallthru
      _
    // Predicated region
    $region30: #{tpu_custom_call.1} parent=1 // pred_check
      _
    $region31: #{tpu_custom_call.1} parent=1 // pred_check_branch
      %237 = sbr.rel (0) target = $region33
    $region32: #{tpu_custom_call.1} parent=1 // pred_region
      %s239 = ssub.s32 32, 32
      %240 = vsyncadd [#allocation9], %s239
      %s241 = sshll.u32 [#allocation8], 4
      %s242 = int_to_ptr.vmem [resolvable:$true] %s241
      %247 = dma.vmem_to_hbm [thread:$0]  %s242, 32, %s5, [#allocation9], 16, 16, 1
    $region33: #{tpu_custom_call.1} parent=1 // pred_fallthru
      _
    // Predicated region
    $region34: #{tpu_custom_call.1} parent=1 // pred_check
      _
    $region35: #{tpu_custom_call.1} parent=1 // pred_check_branch
      %249 = sbr.rel (0) target = $region37
    $region36: #{tpu_custom_call.1} parent=1 // pred_region
      %250 = dma.done [#allocation4], 256
    $region37: #{tpu_custom_call.1} parent=1 // pred_fallthru
      _
    // Predicated region
    $region38: #{tpu_custom_call.1} parent=1 // pred_check
      _
    $region39: #{tpu_custom_call.1} parent=1 // pred_check_branch
      %252 = sbr.rel (0) target = $region41
    $region40: #{tpu_custom_call.1} parent=1 // pred_region
      %253 = dma.done [#allocation9], 32
    $region41: #{tpu_custom_call.1} parent=1 // pred_fallthru
      _
    %254 = vsyncpa [#allocation3], 1
    %255 = vsyncpa [#allocation6], 1
    %256 = vsyncpa [#allocation4], 1
    %257 = vsyncpa [#allocation9], 1

// kernel: tpu_custom_call.1
$region0: #{tpu_custom_call.1}
  #allocation0 [shape = 'u32[]', space=smem, size = 0x4, offset = 0x4, fixed_abs, tag = 'smem constant byte address 0x4 - core index']
  #allocation1 [shape = 'u32[144,128]{1,0:T(1,128)}', space=vmem, size = 0x12000, scoped, tag = 'internal scratch']
  %s0 = inlined_call_operand.hbm [shape: f32[2,8,128], index: 0, kind: input, shape index: {}]
  %s1 = inlined_call_operand.hbm [shape: f32[128,128], index: 1, kind: input, shape index: {}]
  %s2 = inlined_call_operand.vmem [shape: f32[1,128], index: 2, kind: input, shape index: {}]
  %s3 = inlined_call_operand.vmem [shape: f32[1,128], index: 3, kind: input, shape index: {}]
  %s4 = inlined_call_operand.hbm [shape: f32[2,8,128], index: 4, kind: output, shape index: {0}]
  %s5 = inlined_call_operand.hbm [shape: f32[2,1,128], index: 5, kind: output, shape index: {1}]
  %6 = xla_tuple %s4, %s5
  %s7 = sld [smem:[#allocation0]]
  $region42: #{tpu_custom_call.1} parent=0
    _
  %s9 = ssub.s32 1, %s7
  %s10 = scalar_select 0, %s9, %s7
  $region1: #{tpu_custom_call.1} parent=0
    #allocation2 [shape = 'u8[8192]{0}', space=vmem, size = 0x2000, scoped, tag = 'input window, operand 0, single buffered']
    #allocation3 [shape = 's32[1]{0}', space=sflag, size = 0x4, scoped, tag = 'scoped memory for tpu_custom_call.1']
    #allocation4 [shape = 's32[1]{0}', space=sflag, size = 0x4, scoped, tag = 'scoped memory for tpu_custom_call.1']
    #allocation5 [shape = 'u8[65536]{0}', space=vmem, size = 0x10000, scoped, tag = 'input window, operand 1, single buffered']
    #allocation6 [shape = 's32[1]{0}', space=sflag, size = 0x4, scoped, tag = 'scoped memory for tpu_custom_call.1']
    #allocation7 [shape = 'u8[8192]{0}', space=vmem, size = 0x2000, scoped, tag = 'output window, operand 0, single buffered']
    #allocation8 [shape = 'u8[1024]{0}', space=vmem, size = 0x400, scoped, tag = 'output window, operand 1, single buffered']
    #allocation9 [shape = 's32[1]{0}', space=sflag, size = 0x4, scoped, tag = 'scoped memory for tpu_custom_call.1']
    %11 = vsyncpa [#allocation3], 0
    %12 = vsyncpa [#allocation6], 0
    %13 = vsyncpa [#allocation4], 0
    %14 = vsyncpa [#allocation9], 0
    // Predicated region
    $region2: #{tpu_custom_call.1} parent=1 // pred_check
      _
    $region3: #{tpu_custom_call.1} parent=1 // pred_check_branch
      %16 = sbr.rel (0) target = $region5
    $region4: #{tpu_custom_call.1} parent=1 // pred_region
      %s18 = ssub.s32 256, 256
      %19 = vsyncadd [#allocation3], %s18
      %s20 = sshll.u32 [#allocation2], 4
      %s21 = int_to_ptr.vmem [resolvable:$true] %s20
      %26 = dma.hbm_to_vmem [thread:$0]  %s0, 256, %s21, [#allocation3], 128, 128, 8
    $region5: #{tpu_custom_call.1} parent=1 // pred_fallthru
      _
    // Predicated region
    $region6: #{tpu_custom_call.1} parent=1 // pred_check
      _
    $region7: #{tpu_custom_call.1} parent=1 // pred_check_branch
      %28 = sbr.rel (0) target = $region9
    $region8: #{tpu_custom_call.1} parent=1 // pred_region
      %s30 = ssub.s32 2048, 2048
      %31 = vsyncadd [#allocation6], %s30
      %s32 = sshll.u32 [#allocation5], 4
      %s33 = int_to_ptr.vmem [resolvable:$true] %s32
      %38 = dma.hbm_to_vmem [thread:$0]  %s1, 2048, %s33, [#allocation6], 128, 128, 8
    $region9: #{tpu_custom_call.1} parent=1 // pred_fallthru
      _
    // Predicated region
    $region10: #{tpu_custom_call.1} parent=1 // pred_check
      _
    $region11: #{tpu_custom_call.1} parent=1 // pred_check_branch
      %40 = sbr.rel (0) target = $region13
    $region12: #{tpu_custom_call.1} parent=1 // pred_region
      _
    $region13: #{tpu_custom_call.1} parent=1 // pred_fallthru
      _
    // Predicated region
    $region14: #{tpu_custom_call.1} parent=1 // pred_check
      _
    $region15: #{tpu_custom_call.1} parent=1 // pred_check_branch
      %42 = sbr.rel (0) target = $region17
    $region16: #{tpu_custom_call.1} parent=1 // pred_region
      _
    $region17: #{tpu_custom_call.1} parent=1 // pred_fallthru
      _
    // Predicated region
    $region18: #{tpu_custom_call.1} parent=1 // pred_check
      _
    $region19: #{tpu_custom_call.1} parent=1 // pred_check_branch
      %44 = sbr.rel (0) target = $region21
    $region20: #{tpu_custom_call.1} parent=1 // pred_region
      %45 = dma.done [#allocation3], 256
    $region21: #{tpu_custom_call.1} parent=1 // pred_fallthru
      _
    // Predicated region
    $region22: #{tpu_custom_call.1} parent=1 // pred_check
      _
    $region23: #{tpu_custom_call.1} parent=1 // pred_check_branch
      %47 = sbr.rel (0) target = $region25
    $region24: #{tpu_custom_call.1} parent=1 // pred_region
      %48 = dma.done [#allocation6], 2048
    $region25: #{tpu_custom_call.1} parent=1 // pred_fallthru
      _
    %v49 = vld [vmem:[#allocation2] sm:$0xff]
    %v50 = vld [vmem:[#allocation2 + $0x8] sm:$0xff]
    %v51 = vld [vmem:[#allocation5] sm:$0xff]
    %v52 = vld [vmem:[#allocation5 + $0x8] sm:$0xff]
    %v53 = vld [vmem:[#allocation5 + $0x10] sm:$0xff]
    %v54 = vld [vmem:[#allocation5 + $0x18] sm:$0xff]
    %v55 = vld [vmem:[#allocation5 + $0x20] sm:$0xff]
    %v56 = vld [vmem:[#allocation5 + $0x28] sm:$0xff]
    %v57 = vld [vmem:[#allocation5 + $0x30] sm:$0xff]
    %v58 = vld [vmem:[#allocation5 + $0x38] sm:$0xff]
    %v59 = vld [vmem:[#allocation5 + $0x40] sm:$0xff]
    %v60 = vld [vmem:[#allocation5 + $0x48] sm:$0xff]
    %v61 = vld [vmem:[#allocation5 + $0x50] sm:$0xff]
    %v62 = vld [vmem:[#allocation5 + $0x58] sm:$0xff]
    %v63 = vld [vmem:[#allocation5 + $0x60] sm:$0xff]
    %v64 = vld [vmem:[#allocation5 + $0x68] sm:$0xff]
    %v65 = vld [vmem:[#allocation5 + $0x70] sm:$0xff]
    %v66 = vld [vmem:[#allocation5 + $0x78] sm:$0xff]
    %v67 = vld [vmem:[%s2] sm:$0x1]
    %v69 = vlaneseq
    %v70 = vshrl.u32 %v69, 7
    %v71 = vsub.s32 0, %v70
    %v72 = vrot.slane %v67, %v71
    %74 = vmatprep.subr.mxu0 0.0
    %75 = vmatpush1.msra.mxu0 %v66
    %76 = vmatprep.subr.mxu0 0.0
    %77 = vmatpush1.msra.mxu0 %v65
    %78 = vmatprep.subr.mxu0 0.0
    %79 = vmatpush1.msra.mxu0 %v64
    %80 = vmatprep.subr.mxu0 0.0
    %81 = vmatpush1.msra.mxu0 %v63
    %82 = vmatprep.subr.mxu0 0.0
    %83 = vmatpush1.msra.mxu0 %v62
    %84 = vmatprep.subr.mxu0 0.0
    %85 = vmatpush1.msra.mxu0 %v61
    %86 = vmatprep.subr.mxu0 0.0
    %87 = vmatpush1.msra.mxu0 %v60
    %88 = vmatprep.subr.mxu0 0.0
    %89 = vmatpush1.msra.mxu0 %v59
    %90 = vmatprep.subr.mxu0 0.0
    %91 = vmatpush1.msra.mxu0 %v58
    %92 = vmatprep.subr.mxu0 0.0
    %93 = vmatpush1.msra.mxu0 %v57
    %94 = vmatprep.subr.mxu0 0.0
    %95 = vmatpush1.msra.mxu0 %v56
    %96 = vmatprep.subr.mxu0 0.0
    %97 = vmatpush1.msra.mxu0 %v55
    %98 = vmatprep.subr.mxu0 0.0
    %99 = vmatpush1.msra.mxu0 %v54
    %100 = vmatprep.subr.mxu0 0.0
    %101 = vmatpush1.msra.mxu0 %v53
    %102 = vmatprep.subr.mxu0 0.0
    %103 = vmatpush1.msra.mxu0 %v52
    %104 = vmatprep.subr.mxu0 0.0
    %105 = vmatpush1.msra.mxu0 %v51
    %106 = vmatprep.subr.mxu0 0.0
    %107 = vmatpush2.msra.mxu0 0.0
    %108 = vmatprep.subr.mxu0 0.0
    %109 = vmatpush2.msra.mxu0 0.0
    %110 = vmatprep.subr.mxu0 0.0
    %111 = vmatpush2.msra.mxu0 0.0
    %112 = vmatprep.subr.mxu0 0.0
    %113 = vmatpush2.msra.mxu0 0.0
    %114 = vmatprep.subr.mxu0 0.0
    %115 = vmatpush2.msra.mxu0 0.0
    %116 = vmatprep.subr.mxu0 0.0
    %117 = vmatpush2.msra.mxu0 0.0
    %118 = vmatprep.subr.mxu0 0.0
    %119 = vmatpush2.msra.mxu0 0.0
    %120 = vmatprep.subr.mxu0 0.0
    %121 = vmatpush2.msra.mxu0 0.0
    %122 = vmatprep.subr.mxu0 0.0
    %123 = vmatpush2.msra.mxu0 0.0
    %124 = vmatprep.subr.mxu0 0.0
    %125 = vmatpush2.msra.mxu0 0.0
    %126 = vmatprep.subr.mxu0 0.0
    %127 = vmatpush2.msra.mxu0 0.0
    %128 = vmatprep.subr.mxu0 0.0
    %129 = vmatpush2.msra.mxu0 0.0
    %130 = vmatprep.subr.mxu0 0.0
    %131 = vmatpush2.msra.mxu0 0.0
    %132 = vmatprep.subr.mxu0 0.0
    %133 = vmatpush2.msra.mxu0 0.0
    %134 = vmatprep.subr.mxu0 0.0
    %135 = vmatpush2.msra.mxu0 0.0
    %136 = vmatprep.subr.mxu0 0.0
    %137 = vmatpush2.msra.mxu0 0.0
    %138 = vmatprep.mubr.f32.mxu0 0.0
    %139 = vmatmul.mubr.f32.gmra.mxu0 %v49
    %v140 = vpop.f32.mrf.mxu0
    %v141 = vadd.f32 %v72, %v140
    %v142 = vpop.f32.mrf.mxu0
    %143 = vmatprep.mubr.f32.mxu0 0.0
    %144 = vmatmul.mubr.f32.gmra.mxu0 %v50
    %v145 = vpop.f32.mrf.mxu0
    %v146 = vadd.f32 %v72, %v145
    %v147 = vpop.f32.mrf.mxu0
    %148 = vdwg.mxu0
    %v149 = vld [vmem:[%s3] sm:$0x1]
    %v151 = vlaneseq
    %v152 = vshrl.u32 %v151, 7
    %v153 = vsub.s32 0, %v152
    %v154 = vrot.slane %v149, %v153
    %v156 = vmul.f32 %v141, %v154
    %v157 = vmul.f32 %v146, %v154
    %158 = vadd.xlane.f32.xlu0 %v156
    %v159 = vpop.xlane.xlu0 %158
    %160 = vadd.xlane.f32.xlu0 %v157
    %v161 = vpop.xlane.xlu0 %160
    %v162 = vrot.slane %v159, 4
    %v163 = vmax.f32 %v159, %v162
    %v164 = vrot.slane %v163, 2
    %v165 = vmax.f32 %v163, %v164
    %v166 = vrot.slane %v165, 1
    %v167 = vmax.f32 %v165, %v166
    %v168 = vrot.slane %v161, 4
    %v169 = vmax.f32 %v161, %v168
    %v170 = vrot.slane %v169, 2
    %v171 = vmax.f32 %v169, %v170
    %v172 = vrot.slane %v171, 1
    %v173 = vmax.f32 %v171, %v172
    %v174 = vsub.f32 %v159, %v167
    %v175 = vsub.f32 %v161, %v173
    %v176 = vmul.f32 %v174, 1.442695
    %v177 = vpow.pop %v176
    %v178 = vmul.f32 %v175, 1.442695
    %v179 = vpow.pop %v178
    %v180 = vrot.slane %v177, 4
    %v181 = vadd.f32 %v177, %v180
    %v182 = vrot.slane %v181, 2
    %v183 = vadd.f32 %v181, %v182
    %v184 = vrot.slane %v183, 1
    %v185 = vadd.f32 %v183, %v184
    %v186 = vrot.slane %v179, 4
    %v187 = vadd.f32 %v179, %v186
    %v188 = vrot.slane %v187, 2
    %v189 = vadd.f32 %v187, %v188
    %v190 = vrot.slane %v189, 1
    %v191 = vadd.f32 %v189, %v190
    %v192 = vrcp.pop %v185
    %v193 = vrcp.pop %v191
    %v194 = vmul.f32 %v177, %v192
    %v195 = vmul.f32 %v179, %v193
    %v196 = vmul.f32 %v194, %v141
    %v197 = vmul.f32 %v195, %v146
    %v198 = vrot.slane %v196, 4
    %v199 = vadd.f32 %v196, %v198
    %v200 = vrot.slane %v199, 2
    %v201 = vadd.f32 %v199, %v200
    %v202 = vrot.slane %v201, 1
    %v203 = vadd.f32 %v201, %v202
    %v204 = vrot.slane %v197, 4
    %v205 = vadd.f32 %v197, %v204
    %v206 = vrot.slane %v205, 2
    %v207 = vadd.f32 %v205, %v206
    %v208 = vrot.slane %v207, 1
    %v209 = vadd.f32 %v207, %v208
    %v210 = vmul.f32 %v203, %v203
    %v211 = vmul.f32 %v209, %v209
    %212 = vadd.xlane.f32.xlu0 %v210
    %v213 = vpop.xlane.xlu0 %212
    %214 = vadd.xlane.f32.xlu0 %v211
    %v215 = vpop.xlane.xlu0 %214
    %v216 = vrsqrt.pop %v213
    %v217 = vrsqrt.pop %v215
    %v218 = vmul.f32 %v203, %v216
    %v219 = vmul.f32 %v209, %v217
    %220 = vst [vmem:[#allocation7] sm:$0xff] %v141
    %221 = vst [vmem:[#allocation7 + $0x8] sm:$0xff] %v146
    %222 = vst [vmem:[#allocation8] sm:$0x1] %v218
    %223 = vst [vmem:[#allocation8 + $0x1] sm:$0x1] %v219
    // Predicated region
    $region26: #{tpu_custom_call.1} parent=1 // pred_check
      _
    $region27: #{tpu_custom_call.1} parent=1 // pred_check_branch
      %225 = sbr.rel (0) target = $region29
    $region28: #{tpu_custom_call.1} parent=1 // pred_region
      %s227 = ssub.s32 256, 256
      %228 = vsyncadd [#allocation4], %s227
      %s229 = sshll.u32 [#allocation7], 4
      %s230 = int_to_ptr.vmem [resolvable:$true] %s229
      %235 = dma.vmem_to_hbm [thread:$0]  %s230, 256, %s4, [#allocation4], 128, 128, 8
    $region29: #{tpu_custom_call.1} parent=1 // pred_fallthru
      _
    // Predicated region
    $region30: #{tpu_custom_call.1} parent=1 // pred_check
      _
    $region31: #{tpu_custom_call.1} parent=1 // pred_check_branch
      %237 = sbr.rel (0) target = $region33
    $region32: #{tpu_custom_call.1} parent=1 // pred_region
      %s239 = ssub.s32 32, 32
      %240 = vsyncadd [#allocation9], %s239
      %s241 = sshll.u32 [#allocation8], 4
      %s242 = int_to_ptr.vmem [resolvable:$true] %s241
      %247 = dma.vmem_to_hbm [thread:$0]  %s242, 32, %s5, [#allocation9], 16, 16, 1
    $region33: #{tpu_custom_call.1} parent=1 // pred_fallthru
      _
    // Predicated region
    $region34: #{tpu_custom_call.1} parent=1 // pred_check
      _
    $region35: #{tpu_custom_call.1} parent=1 // pred_check_branch
      %249 = sbr.rel (0) target = $region37
    $region36: #{tpu_custom_call.1} parent=1 // pred_region
      %250 = dma.done [#allocation4], 256
    $region37: #{tpu_custom_call.1} parent=1 // pred_fallthru
      _
    // Predicated region
    $region38: #{tpu_custom_call.1} parent=1 // pred_check
      _
    $region39: #{tpu_custom_call.1} parent=1 // pred_check_branch
      %252 = sbr.rel (0) target = $region41
    $region40: #{tpu_custom_call.1} parent=1 // pred_region
      %253 = dma.done [#allocation9], 32
    $region41: #{tpu_custom_call.1} parent=1 // pred_fallthru
      _
    %254 = vsyncpa [#allocation3], 1
    %255 = vsyncpa [#allocation6], 1
    %256 = vsyncpa [#allocation4], 1
    %257 = vsyncpa [#allocation9], 1

</llo_original>
